<compile_context>
chip_gen: v5e
topology: v5e:2x2
jax: 0.10.0
libtpu: 0.0.40
codegen_flags: <defaults>
</compile_context>

<pallas_src>
import jax
import jax.numpy as jnp
from jax import lax
from jax.experimental import pallas as pl
from jax.experimental.pallas import tpu as pltpu

# ---- hyper-parameters implied by EA.__init__ (small synthetic values) ----
WORD_EMBED_DIM = 16            # word_embed_dim
DIST_EMBED_DIM = 8             # distance_embed_dim
CONV_FILTERS   = 32            # conv_filter_cnt
NUM_CLASSES    = 4             # len(relation_cls_label_map)
WORD_VOCAB     = 20            # len(word_vocab)
DIST_VOCAB     = 10            # dist_vocab_size
SEQ_LEN        = 16            # time_steps
BATCH          = 2

INPUT_DIM = WORD_EMBED_DIM + 2 * DIST_EMBED_DIM          # D = 32
ATTN_DIM  = INPUT_DIM + WORD_EMBED_DIM                   # A = 48 (attn linear dims)
FEAT_DIM  = CONV_FILTERS + 2 * INPUT_DIM                 # 96 (dense input dim)
VOCAB_TOT = WORD_VOCAB + 2 * DIST_VOCAB                  # 40 (combined one-hot width)

NEG_BIG = -1e30  # stand-in for masked_fill_(-inf) (identical post-softmax)


def ea_kernel(wseq_ref, d1_ref, d2_ref, arg1_ref, arg2_ref, mask_ref,
              wmain_ref, waarg_ref, wr_ref, wd_ref, bias_ref, out_ref):
    BT = wseq_ref.shape[0]
    B, C = out_ref.shape
    T = BT // B
    D = INPUT_DIM
    A2 = 2 * ATTN_DIM
    F = CONV_FILTERS
    WV, DV = WORD_VOCAB, DIST_VOCAB

    mask = mask_ref[...]                                  # (BT, 1), 1.0 = valid token

    # ---- fused embedding lookup: one-hot over the combined [word|dist1|dist2] vocab ----
    viota = lax.broadcasted_iota(jnp.int32, (BT, VOCAB_TOT), 1)
    onehot = ((viota == wseq_ref[...])
              | (viota == d1_ref[...] + WV)
              | (viota == d2_ref[...] + WV + DV)).astype(jnp.float32)
    # The attention softmax zeroes padded positions anyway, so masking the one-hot here
    # is semantically equivalent AND gives the CNN its masked input for free.
    onehot = onehot * mask

    # one GEMM -> [ x | x @ wa_x | x @ wconv ]   (embedding tables folded into weights)
    main = jnp.dot(onehot, wmain_ref[...], preferred_element_type=jnp.float32)   # (BT, D+2A+3F)
    x_flat = main[:, 0:D]                    # (BT, D)   masked input embeddings
    h_pre  = main[:, D:D + A2]               # (BT, 2A)  x-part of both attention branches
    taps   = main[:, D + A2:]                # (BT, 3F)  masked conv taps (t-1 | t | t+1)

    # ---- entity attention (both entities fused; arg path folded through word embed) ----
    aiota = lax.broadcasted_iota(jnp.int32, (B, 2 * WV), 1)
    onehot_arg = ((aiota == arg1_ref[...])
                  | (aiota == arg2_ref[...] + WV)).astype(jnp.float32)            # (B, 2*WV)
    arg_term = jnp.dot(onehot_arg, waarg_ref[...], preferred_element_type=jnp.float32)  # (B, 2A)
    arg_rep = jnp.broadcast_to(arg_term[:, None, :], (B, T, A2)).reshape(BT, A2)
    h = jnp.tanh(h_pre + arg_rep)                                                  # (BT, 2A)
    s = jnp.dot(h, wr_ref[...], preferred_element_type=jnp.float32)                # (BT, 2)
    # masked_fill(-inf); NOTE: a fully-masked row would yield a uniform alpha here
    # (PyTorch would produce NaN) - not exercised by this workload.
    s = jnp.where(mask > 0.0, s, NEG_BIG)
    s3 = s.reshape(B, T, 2)
    s3 = s3 - jnp.max(s3, axis=1, keepdims=True)          # per-batch softmax over T
    e3 = jnp.exp(s3)
    alpha = e3 / jnp.sum(e3, axis=1, keepdims=True)        # exact softmax (no approx recip)
    x3 = x_flat.reshape(B, T, D)
    v1 = jnp.sum(alpha[:, :, 0:1] * x3, axis=1)            # (B, D) attention pooling
    v2 = jnp.sum(alpha[:, :, 1:2] * x3, axis=1)            # (B, D)

    # ---- CNN: Conv1d(k=3, padding=1) via rolled taps, max over T, tanh ----
    t_pos = lax.broadcasted_iota(jnp.int32, (BT, 1), 0) % T
    m_prev = (t_pos > 0).astype(jnp.float32)               # a t-1 neighbour exists
    m_next = (t_pos < T - 1).astype(jnp.float32)           # a t+1 neighbour exists
    bias = bias_ref[...]
    cb = bias[:, 0:F]
    conv = (taps[:, F:2 * F] + cb
            + m_prev * pltpu.roll(taps[:, 0:F], shift=1, axis=0)
            + m_next * pltpu.roll(taps[:, 2 * F:3 * F], shift=BT - 1, axis=0))     # (BT, F)
    cnn_out = jnp.tanh(jnp.max(conv.reshape(B, T, F), axis=1))                     # (B, F)

    # ---- dense + softmax (inference branch); dense weight row-sliced instead of a concat ----
    wd = wd_ref[...]
    bd = bias[:, F:F + C]
    logits = (jnp.dot(cnn_out, wd[0:F, :], preferred_element_type=jnp.float32)
              + jnp.dot(v1, wd[F:F + D, :], preferred_element_type=jnp.float32)
              + jnp.dot(v2, wd[F + D:F + 2 * D, :], preferred_element_type=jnp.float32)
              + bd)                                                                # (B, C)
    logits = logits - jnp.max(logits, axis=1, keepdims=True)
    el = jnp.exp(logits)
    # TODO(synk): for large B pad the output to a lane-dense (B_pad, 128) slab.
    out_ref[...] = el / jnp.sum(el, axis=1, keepdims=True)


def fuse_params(p):
    """ONE-TIME (init) re-layout of the PyTorch-style weights into the fused kernel layout."""
    D, Dw, Dd = INPUT_DIM, WORD_EMBED_DIM, DIST_EMBED_DIM
    A, F = ATTN_DIM, CONV_FILTERS
    WV, DV = WORD_VOCAB, DIST_VOCAB
    # block-diagonal embedding table: onehot([w, WV+d1, WV+DV+d2]) @ emb == [We[w]|D1[d1]|D2[d2]]
    emb = jnp.zeros((VOCAB_TOT, D), jnp.float32)
    emb = emb.at[:WV, :Dw].set(p["word_embed"])
    emb = emb.at[WV:WV + DV, Dw:Dw + Dd].set(p["dist1_embed"])
    emb = emb.at[WV + DV:, Dw + Dd:].set(p["dist2_embed"])
    # x-part of both attention 'a' weights fused column-wise, conv taps stacked column-wise
    wa_x = jnp.concatenate([p["wa1"][:D], p["wa2"][:D]], axis=1)          # (D, 2A)
    wc = jnp.concatenate([p["w0"], p["w1"], p["w2"]], axis=1)             # (D, 3F)
    # mega weight: onehot @ w_main == [ x | x@wa_x | x@wc ]
    w_main = jnp.concatenate([emb, emb @ wa_x, emb @ wc], axis=1)         # (VOCAB_TOT, D+2A+3F)
    # arg attention path folded through the word embedding:
    #   onehot_arg(B, 2*WV) @ wa_arg == [ We[arg1]@wa1_arg | We[arg2]@wa2_arg ]
    wa_arg = jnp.zeros((2 * WV, 2 * A), jnp.float32)
    wa_arg = wa_arg.at[:WV, :A].set(p["word_embed"] @ p["wa1"][D:])
    wa_arg = wa_arg.at[WV:, A:].set(p["word_embed"] @ p["wa2"][D:])
    # 'r' projections block-diagonal: column e holds entity e's score
    wr = jnp.zeros((2 * A, 2), jnp.float32)
    wr = wr.at[:A, 0:1].set(p["wr1"]).at[A:, 1:2].set(p["wr2"])
    bias = jnp.concatenate([p["cb"], p["bd"]], axis=1)                    # (1, F + C)
    return dict(w_main=w_main, wa_arg=wa_arg, wr=wr, wd=p["wd"], bias=bias)


@jax.jit
def ea_forward(fused, words_seq, words_mask, d1_seq, d2_seq, arg1, arg2):
    B, T = words_seq.shape
    BT = B * T
    C = NUM_CLASSES
    # Per-call glue is only free reshapes / dtype casts; gathers, concats, the tile'd
    # boundary masks and the weight re-layout are all gone (fused into the kernel or init).
    args = (words_seq.reshape(BT, 1).astype(jnp.int32),
            d1_seq.reshape(BT, 1).astype(jnp.int32),
            d2_seq.reshape(BT, 1).astype(jnp.int32),
            arg1.reshape(B, 1).astype(jnp.int32),
            arg2.reshape(B, 1).astype(jnp.int32),
            words_mask.reshape(BT, 1).astype(jnp.float32),
            fused["w_main"], fused["wa_arg"], fused["wr"], fused["wd"], fused["bias"])

    flops = 2 * (BT * VOCAB_TOT * (INPUT_DIM + 2 * ATTN_DIM + 3 * CONV_FILTERS)
                 + B * 2 * WORD_VOCAB * 2 * ATTN_DIM
                 + BT * 2 * ATTN_DIM * 2
                 + B * FEAT_DIM * C)
    transcendentals = BT * 2 * ATTN_DIM + BT * 2 + B * (CONV_FILTERS + C)
    bytes_accessed = sum(int(a.size) * a.dtype.itemsize for a in args) + B * C * 4

    # Grid-less single invocation: the whole problem fits VMEM with huge headroom, so no
    # software-pipeline prologue / double-buffering is paid for a 1-step grid.
    # TODO(synk): when B grows, tile the batch axis (multiple-of-8 row blocks), mark it
    # "parallel" (2 TensorCores on v7x) and re-derive VMEM tiling for its 64 MiB VMEM.
    return pl.pallas_call(
        ea_kernel,
        out_shape=jax.ShapeDtypeStruct((B, C), jnp.float32),
        cost_estimate=pl.CostEstimate(flops=flops, transcendentals=transcendentals,
                                      bytes_accessed=bytes_accessed),
    )(*args)


def ref_forward(params, words_seq, words_mask, d1_seq, d2_seq, arg1, arg2):
    """Pure-JAX reference mirroring the PyTorch forward (inference path)."""
    we = params["word_embed"][words_seq]
    d1 = params["dist1_embed"][d1_seq]
    d2 = params["dist2_embed"][d2_seq]
    a1 = params["word_embed"][arg1[:, 0]]
    a2 = params["word_embed"][arg2[:, 0]]
    inp = jnp.concatenate([we, d1, d2], axis=2).astype(jnp.float32)
    B, T, D = inp.shape
    mask = words_mask.astype(jnp.float32)

    def attn(arg, wa, wr):
        arg_rep = jnp.broadcast_to(arg[:, None, :], (B, T, arg.shape[-1]))
        xi = jnp.concatenate([inp, arg_rep], axis=2)
        h = jnp.tanh(xi @ wa)
        s = (h @ wr)[..., 0]
        s = jnp.where(mask > 0, s, NEG_BIG)
        s = jax.nn.softmax(s, axis=1)
        return jnp.einsum("bt,btd->bd", s, inp)

    v1 = attn(a1, params["wa1"], params["wr1"])
    v2 = attn(a2, params["wa2"], params["wr2"])

    xm = inp * mask[:, :, None]
    zero = jnp.zeros((B, 1, D), jnp.float32)
    xp = jnp.concatenate([zero, xm[:, :-1]], axis=1)
    xn = jnp.concatenate([xm[:, 1:], zero], axis=1)
    conv = xp @ params["w0"] + xm @ params["w1"] + xn @ params["w2"] + params["cb"]
    cnn = jnp.tanh(jnp.max(conv, axis=1))

    feat = jnp.concatenate([cnn, v1, v2], axis=1)
    logits = feat @ params["wd"] + params["bd"]
    return jax.nn.softmax(logits, axis=1)


def make_params(key):
    ks = jax.random.split(key, 12)
    norm = lambda k, s, sc=0.1: (sc * jax.random.normal(k, s)).astype(jnp.float32)
    word_embed = norm(ks[0], (WORD_VOCAB, WORD_EMBED_DIM)).at[0].set(0.0)   # padding_idx=0
    dist1_embed = norm(ks[1], (DIST_VOCAB, DIST_EMBED_DIM)).at[0].set(0.0)
    dist2_embed = norm(ks[2], (DIST_VOCAB, DIST_EMBED_DIM)).at[0].set(0.0)
    conv_w = norm(ks[7], (CONV_FILTERS, INPUT_DIM, 3))                      # PyTorch (F, D, K)
    return dict(
        word_embed=word_embed, dist1_embed=dist1_embed, dist2_embed=dist2_embed,
        wa1=norm(ks[3], (ATTN_DIM, ATTN_DIM)),     # stored input-major (== W.T)
        wr1=norm(ks[4], (ATTN_DIM, 1)),
        wa2=norm(ks[5], (ATTN_DIM, ATTN_DIM)),
        wr2=norm(ks[6], (ATTN_DIM, 1)),
        w0=jnp.transpose(conv_w[:, :, 0]),         # (D, F) tap at t-1
        w1=jnp.transpose(conv_w[:, :, 1]),         # (D, F) tap at t
        w2=jnp.transpose(conv_w[:, :, 2]),         # (D, F) tap at t+1
        cb=norm(ks[8], (1, CONV_FILTERS)),
        wd=norm(ks[9], (FEAT_DIM, NUM_CLASSES)),   # stored input-major (== W.T)
        bd=norm(ks[10], (1, NUM_CLASSES)),
    )


if __name__ == "__main__":
    key = jax.random.PRNGKey(0)
    kp, k1, k2, k3, k4, k5 = jax.random.split(key, 6)
    params = make_params(kp)
    fused = fuse_params(params)   # hoisted: one-time weight re-layout (init, not per call)

    B, T = BATCH, SEQ_LEN
    # words_mask: batch 0 fully valid, batch 1 has 4 padded positions at the end
    words_mask = jnp.ones((B, T), jnp.float32).at[1, T - 4:].set(0.0)
    valid = words_mask > 0
    words_seq = jnp.where(valid, jax.random.randint(k1, (B, T), 1, WORD_VOCAB), 0)
    d1_seq = jnp.where(valid, jax.random.randint(k2, (B, T), 1, DIST_VOCAB), 0)
    d2_seq = jnp.where(valid, jax.random.randint(k3, (B, T), 1, DIST_VOCAB), 0)
    arg1 = jax.random.randint(k4, (B, 1), 1, WORD_VOCAB)
    arg2 = jax.random.randint(k5, (B, 1), 1, WORD_VOCAB)

    out = ea_forward(fused, words_seq, words_mask, d1_seq, d2_seq, arg1, arg2)
    out = jax.block_until_ready(out)

    ref = ref_forward(params, words_seq, words_mask, d1_seq, d2_seq, arg1, arg2)
    assert out.shape == (B, NUM_CLASSES)
    # exact softmax restored -> tight tolerance again (only weight-folding reassociation left)
    assert jnp.allclose(out, ref, atol=1e-5, rtol=1e-5), (out, ref)
    print("KERNEL_OK")
</pallas_src>

<mosaic_0001>
module attributes {stable_mosaic.version = 11 : i64} {
  func.func @ea_kernel(%arg0: memref<32x1xi32, #tpu.memory_space<vmem>>, %arg1: memref<32x1xi32, #tpu.memory_space<vmem>>, %arg2: memref<32x1xi32, #tpu.memory_space<vmem>>, %arg3: memref<2x1xi32, #tpu.memory_space<vmem>>, %arg4: memref<2x1xi32, #tpu.memory_space<vmem>>, %arg5: memref<32x1xf32, #tpu.memory_space<vmem>>, %arg6: memref<40x224xf32, #tpu.memory_space<vmem>>, %arg7: memref<40x96xf32, #tpu.memory_space<vmem>>, %arg8: memref<96x2xf32, #tpu.memory_space<vmem>>, %arg9: memref<96x4xf32, #tpu.memory_space<vmem>>, %arg10: memref<1x36xf32, #tpu.memory_space<vmem>>, %arg11: memref<2x4xf32, #tpu.memory_space<vmem>>) attributes {dimension_semantics = [], scalar_prefetch = 0 : i64, scratch_operands = 0 : i64, tpu.core_type = #tpu.core_type<tc>} {
    %c0 = arith.constant 0 : index
    %c0_0 = arith.constant 0 : index
    %0 = vector.load %arg5[%c0, %c0_0] : memref<32x1xf32, #tpu.memory_space<vmem>>, vector<32x1xf32>
    %1 = tpu.iota {dimensions = array<i32: 1>} : vector<32x40xi32>
    %c0_1 = arith.constant 0 : index
    %c0_2 = arith.constant 0 : index
    %2 = vector.load %arg0[%c0_1, %c0_2] : memref<32x1xi32, #tpu.memory_space<vmem>>, vector<32x1xi32>
    %3 = vector.broadcast %2 : vector<32x1xi32> to vector<32x40xi32>
    %4 = arith.cmpi eq, %1, %3 : vector<32x40xi32>
    %c0_3 = arith.constant 0 : index
    %c0_4 = arith.constant 0 : index
    %5 = vector.load %arg1[%c0_3, %c0_4] : memref<32x1xi32, #tpu.memory_space<vmem>>, vector<32x1xi32>
    %c20_i32 = arith.constant 20 : i32
    %6 = vector.broadcast %c20_i32 : i32 to vector<32x1xi32>
    %7 = arith.addi %5, %6 : vector<32x1xi32>
    %8 = vector.broadcast %7 : vector<32x1xi32> to vector<32x40xi32>
    %9 = arith.cmpi eq, %1, %8 : vector<32x40xi32>
    %10 = arith.ori %4, %9 : vector<32x40xi1>
    %c0_5 = arith.constant 0 : index
    %c0_6 = arith.constant 0 : index
    %11 = vector.load %arg2[%c0_5, %c0_6] : memref<32x1xi32, #tpu.memory_space<vmem>>, vector<32x1xi32>
    %c20_i32_7 = arith.constant 20 : i32
    %12 = vector.broadcast %c20_i32_7 : i32 to vector<32x1xi32>
    %13 = arith.addi %11, %12 : vector<32x1xi32>
    %c10_i32 = arith.constant 10 : i32
    %14 = vector.broadcast %c10_i32 : i32 to vector<32x1xi32>
    %15 = arith.addi %13, %14 : vector<32x1xi32>
    %16 = vector.broadcast %15 : vector<32x1xi32> to vector<32x40xi32>
    %17 = arith.cmpi eq, %1, %16 : vector<32x40xi32>
    %18 = arith.ori %10, %17 : vector<32x40xi1>
    %19 = arith.extui %18 : vector<32x40xi1> to vector<32x40xi32>
    %20 = arith.sitofp %19 : vector<32x40xi32> to vector<32x40xf32>
    %21 = vector.broadcast %0 : vector<32x1xf32> to vector<32x40xf32>
    %22 = arith.mulf %20, %21 : vector<32x40xf32>
    %c0_8 = arith.constant 0 : index
    %c0_9 = arith.constant 0 : index
    %23 = vector.load %arg6[%c0_8, %c0_9] : memref<40x224xf32, #tpu.memory_space<vmem>>, vector<40x224xf32>
    %cst = arith.constant dense<0.000000e+00> : vector<32x224xf32>
    %24 = tpu.matmul %22, %23, %cst {dimension_numbers = #tpu.dot_dimension_numbers<[1], [0], [0], [1], [0, 0, 1, 1], [], []>} : vector<32x40xf32>, vector<40x224xf32>, vector<32x224xf32> -> vector<32x224xf32>
    %25 = vector.extract_strided_slice %24 {offsets = [0, 0], sizes = [32, 32], strides = [1, 1]} : vector<32x224xf32> to vector<32x32xf32>
    %26 = vector.extract_strided_slice %24 {offsets = [0, 32], sizes = [32, 96], strides = [1, 1]} : vector<32x224xf32> to vector<32x96xf32>
    %27 = vector.extract_strided_slice %24 {offsets = [0, 128], sizes = [32, 96], strides = [1, 1]} : vector<32x224xf32> to vector<32x96xf32>
    %28 = tpu.iota {dimensions = array<i32: 1>} : vector<2x40xi32>
    %c0_10 = arith.constant 0 : index
    %c0_11 = arith.constant 0 : index
    %29 = vector.load %arg3[%c0_10, %c0_11] : memref<2x1xi32, #tpu.memory_space<vmem>>, vector<2x1xi32>
    %30 = vector.broadcast %29 : vector<2x1xi32> to vector<2x40xi32>
    %31 = arith.cmpi eq, %28, %30 : vector<2x40xi32>
    %c0_12 = arith.constant 0 : index
    %c0_13 = arith.constant 0 : index
    %32 = vector.load %arg4[%c0_12, %c0_13] : memref<2x1xi32, #tpu.memory_space<vmem>>, vector<2x1xi32>
    %c20_i32_14 = arith.constant 20 : i32
    %33 = vector.broadcast %c20_i32_14 : i32 to vector<2x1xi32>
    %34 = arith.addi %32, %33 : vector<2x1xi32>
    %35 = vector.broadcast %34 : vector<2x1xi32> to vector<2x40xi32>
    %36 = arith.cmpi eq, %28, %35 : vector<2x40xi32>
    %37 = arith.ori %31, %36 : vector<2x40xi1>
    %38 = arith.extui %37 : vector<2x40xi1> to vector<2x40xi32>
    %39 = arith.sitofp %38 : vector<2x40xi32> to vector<2x40xf32>
    %c0_15 = arith.constant 0 : index
    %c0_16 = arith.constant 0 : index
    %40 = vector.load %arg7[%c0_15, %c0_16] : memref<40x96xf32, #tpu.memory_space<vmem>>, vector<40x96xf32>
    %cst_17 = arith.constant dense<0.000000e+00> : vector<2x96xf32>
    %41 = tpu.matmul %39, %40, %cst_17 {dimension_numbers = #tpu.dot_dimension_numbers<[1], [0], [0], [1], [0, 0, 1, 1], [], []>} : vector<2x40xf32>, vector<40x96xf32>, vector<2x96xf32> -> vector<2x96xf32>
    %42 = vector.shape_cast %41 : vector<2x96xf32> to vector<2x1x96xf32>
    %43 = vector.shape_cast %42 : vector<2x1x96xf32> to vector<2x1x96xf32>
    %44 = vector.broadcast %43 : vector<2x1x96xf32> to vector<2x16x96xf32>
    %45 = vector.shape_cast %44 : vector<2x16x96xf32> to vector<32x96xf32>
    %46 = arith.addf %26, %45 : vector<32x96xf32>
    %47 = math.tanh %46 : vector<32x96xf32>
    %c0_18 = arith.constant 0 : index
    %c0_19 = arith.constant 0 : index
    %48 = vector.load %arg8[%c0_18, %c0_19] : memref<96x2xf32, #tpu.memory_space<vmem>>, vector<96x2xf32>
    %cst_20 = arith.constant dense<0.000000e+00> : vector<32x2xf32>
    %49 = tpu.matmul %47, %48, %cst_20 {dimension_numbers = #tpu.dot_dimension_numbers<[1], [0], [0], [1], [0, 0, 1, 1], [], []>} : vector<32x96xf32>, vector<96x2xf32>, vector<32x2xf32> -> vector<32x2xf32>
    %cst_21 = arith.constant 0.000000e+00 : f32
    %50 = vector.broadcast %cst_21 : f32 to vector<32x1xf32>
    %51 = arith.cmpf ogt, %0, %50 : vector<32x1xf32>
    %cst_22 = arith.constant -1.000000e+30 : f32
    %52 = vector.shape_cast %51 : vector<32x1xi1> to vector<32x1xi1>
    %53 = vector.broadcast %52 : vector<32x1xi1> to vector<32x2xi1>
    %54 = vector.broadcast %cst_22 : f32 to vector<32x2xf32>
    %55 = arith.select %53, %49, %54 : vector<32x2xi1>, vector<32x2xf32>
    %56 = vector.shape_cast %55 : vector<32x2xf32> to vector<2x16x2xf32>
    %cst_23 = arith.constant dense<0xFF800000> : vector<2x2xf32>
    %57 = vector.multi_reduction <maximumf>, %56, %cst_23 [1] : vector<2x16x2xf32> to vector<2x2xf32>
    %58 = vector.shape_cast %57 : vector<2x2xf32> to vector<2x1x2xf32>
    %59 = vector.broadcast %58 : vector<2x1x2xf32> to vector<2x16x2xf32>
    %60 = arith.subf %56, %59 : vector<2x16x2xf32>
    %61 = math.exp %60 : vector<2x16x2xf32>
    %cst_24 = arith.constant dense<0.000000e+00> : vector<2x2xf32>
    %62 = vector.multi_reduction <add>, %61, %cst_24 [1] : vector<2x16x2xf32> to vector<2x2xf32>
    %63 = vector.shape_cast %62 : vector<2x2xf32> to vector<2x1x2xf32>
    %64 = vector.broadcast %63 : vector<2x1x2xf32> to vector<2x16x2xf32>
    %65 = arith.divf %61, %64 : vector<2x16x2xf32>
    %66 = vector.shape_cast %25 : vector<32x32xf32> to vector<2x16x32xf32>
    %67 = vector.extract_strided_slice %65 {offsets = [0, 0, 0], sizes = [2, 16, 1], strides = [1, 1, 1]} : vector<2x16x2xf32> to vector<2x16x1xf32>
    %68 = vector.broadcast %67 : vector<2x16x1xf32> to vector<2x16x32xf32>
    %69 = arith.mulf %68, %66 : vector<2x16x32xf32>
    %cst_25 = arith.constant dense<0.000000e+00> : vector<2x32xf32>
    %70 = vector.multi_reduction <add>, %69, %cst_25 [1] : vector<2x16x32xf32> to vector<2x32xf32>
    %71 = vector.extract_strided_slice %65 {offsets = [0, 0, 1], sizes = [2, 16, 1], strides = [1, 1, 1]} : vector<2x16x2xf32> to vector<2x16x1xf32>
    %72 = vector.broadcast %71 : vector<2x16x1xf32> to vector<2x16x32xf32>
    %73 = arith.mulf %72, %66 : vector<2x16x32xf32>
    %cst_26 = arith.constant dense<0.000000e+00> : vector<2x32xf32>
    %74 = vector.multi_reduction <add>, %73, %cst_26 [1] : vector<2x16x32xf32> to vector<2x32xf32>
    %75 = tpu.iota {dimensions = array<i32: 0>} : vector<32x1xi32>
    %c16_i32 = arith.constant 16 : i32
    %c0_i32 = arith.constant 0 : i32
    %76 = arith.cmpi eq, %c16_i32, %c0_i32 : i32
    %c1_i32 = arith.constant 1 : i32
    %77 = arith.select %76, %c1_i32, %c16_i32 : i32
    %78 = vector.broadcast %77 : i32 to vector<32x1xi32>
    %79 = arith.remsi %75, %78 : vector<32x1xi32>
    %c0_i32_27 = arith.constant 0 : i32
    %80 = vector.broadcast %c0_i32_27 : i32 to vector<32x1xi32>
    %81 = arith.cmpi ne, %79, %80 : vector<32x1xi32>
    %c0_i32_28 = arith.constant 0 : i32
    %82 = vector.broadcast %c0_i32_28 : i32 to vector<32x1xi32>
    %83 = arith.cmpi slt, %79, %82 : vector<32x1xi32>
    %c0_i32_29 = arith.constant 0 : i32
    %84 = arith.cmpi slt, %77, %c0_i32_29 : i32
    %85 = vector.broadcast %84 : i1 to vector<32x1xi1>
    %86 = vector.broadcast %85 : vector<32x1xi1> to vector<32x1xi1>
    %87 = arith.xori %83, %86 : vector<32x1xi1>
    %88 = arith.andi %87, %81 : vector<32x1xi1>
    %89 = vector.broadcast %77 : i32 to vector<32x1xi32>
    %90 = arith.addi %79, %89 : vector<32x1xi32>
    %91 = arith.select %88, %90, %79 : vector<32x1xi1>, vector<32x1xi32>
    %c0_i32_30 = arith.constant 0 : i32
    %92 = vector.broadcast %c0_i32_30 : i32 to vector<32x1xi32>
    %93 = arith.cmpi sgt, %91, %92 : vector<32x1xi32>
    %94 = arith.extui %93 : vector<32x1xi1> to vector<32x1xi32>
    %95 = arith.sitofp %94 : vector<32x1xi32> to vector<32x1xf32>
    %c15_i32 = arith.constant 15 : i32
    %96 = vector.broadcast %c15_i32 : i32 to vector<32x1xi32>
    %97 = arith.cmpi slt, %91, %96 : vector<32x1xi32>
    %98 = arith.extui %97 : vector<32x1xi1> to vector<32x1xi32>
    %99 = arith.sitofp %98 : vector<32x1xi32> to vector<32x1xf32>
    %c0_31 = arith.constant 0 : index
    %c0_32 = arith.constant 0 : index
    %100 = vector.load %arg10[%c0_31, %c0_32] : memref<1x36xf32, #tpu.memory_space<vmem>>, vector<1x36xf32>
    %101 = vector.extract_strided_slice %100 {offsets = [0, 0], sizes = [1, 32], strides = [1, 1]} : vector<1x36xf32> to vector<1x32xf32>
    %102 = vector.extract_strided_slice %27 {offsets = [0, 32], sizes = [32, 32], strides = [1, 1]} : vector<32x96xf32> to vector<32x32xf32>
    %103 = vector.broadcast %101 : vector<1x32xf32> to vector<32x32xf32>
    %104 = arith.addf %102, %103 : vector<32x32xf32>
    %105 = vector.extract_strided_slice %27 {offsets = [0, 0], sizes = [32, 32], strides = [1, 1]} : vector<32x96xf32> to vector<32x32xf32>
    %c1_i32_33 = arith.constant 1 : i32
    %106 = tpu.dynamic_rotate %105 by %c1_i32_33 dim 0 : vector<32x32xf32>, i32 -> vector<32x32xf32>
    %107 = vector.broadcast %95 : vector<32x1xf32> to vector<32x32xf32>
    %108 = arith.mulf %107, %106 : vector<32x32xf32>
    %109 = arith.addf %104, %108 : vector<32x32xf32>
    %110 = vector.extract_strided_slice %27 {offsets = [0, 64], sizes = [32, 32], strides = [1, 1]} : vector<32x96xf32> to vector<32x32xf32>
    %c31_i32 = arith.constant 31 : i32
    %111 = tpu.dynamic_rotate %110 by %c31_i32 dim 0 : vector<32x32xf32>, i32 -> vector<32x32xf32>
    %112 = vector.broadcast %99 : vector<32x1xf32> to vector<32x32xf32>
    %113 = arith.mulf %112, %111 : vector<32x32xf32>
    %114 = arith.addf %109, %113 : vector<32x32xf32>
    %115 = vector.shape_cast %114 : vector<32x32xf32> to vector<2x16x32xf32>
    %cst_34 = arith.constant dense<0xFF800000> : vector<2x32xf32>
    %116 = vector.multi_reduction <maximumf>, %115, %cst_34 [1] : vector<2x16x32xf32> to vector<2x32xf32>
    %117 = math.tanh %116 : vector<2x32xf32>
    %c0_35 = arith.constant 0 : index
    %c0_36 = arith.constant 0 : index
    %118 = vector.load %arg9[%c0_35, %c0_36] : memref<96x4xf32, #tpu.memory_space<vmem>>, vector<96x4xf32>
    %119 = vector.extract_strided_slice %100 {offsets = [0, 32], sizes = [1, 4], strides = [1, 1]} : vector<1x36xf32> to vector<1x4xf32>
    %120 = vector.extract_strided_slice %118 {offsets = [0, 0], sizes = [32, 4], strides = [1, 1]} : vector<96x4xf32> to vector<32x4xf32>
    %cst_37 = arith.constant dense<0.000000e+00> : vector<2x4xf32>
    %121 = tpu.matmul %117, %120, %cst_37 {dimension_numbers = #tpu.dot_dimension_numbers<[1], [0], [0], [1], [0, 0, 1, 1], [], []>} : vector<2x32xf32>, vector<32x4xf32>, vector<2x4xf32> -> vector<2x4xf32>
    %122 = vector.extract_strided_slice %118 {offsets = [32, 0], sizes = [32, 4], strides = [1, 1]} : vector<96x4xf32> to vector<32x4xf32>
    %cst_38 = arith.constant dense<0.000000e+00> : vector<2x4xf32>
    %123 = tpu.matmul %70, %122, %cst_38 {dimension_numbers = #tpu.dot_dimension_numbers<[1], [0], [0], [1], [0, 0, 1, 1], [], []>} : vector<2x32xf32>, vector<32x4xf32>, vector<2x4xf32> -> vector<2x4xf32>
    %124 = arith.addf %121, %123 : vector<2x4xf32>
    %125 = vector.extract_strided_slice %118 {offsets = [64, 0], sizes = [32, 4], strides = [1, 1]} : vector<96x4xf32> to vector<32x4xf32>
    %cst_39 = arith.constant dense<0.000000e+00> : vector<2x4xf32>
    %126 = tpu.matmul %74, %125, %cst_39 {dimension_numbers = #tpu.dot_dimension_numbers<[1], [0], [0], [1], [0, 0, 1, 1], [], []>} : vector<2x32xf32>, vector<32x4xf32>, vector<2x4xf32> -> vector<2x4xf32>
    %127 = arith.addf %124, %126 : vector<2x4xf32>
    %128 = vector.broadcast %119 : vector<1x4xf32> to vector<2x4xf32>
    %129 = arith.addf %127, %128 : vector<2x4xf32>
    %cst_40 = arith.constant dense<0xFF800000> : vector<2xf32>
    %130 = vector.multi_reduction <maximumf>, %129, %cst_40 [1] : vector<2x4xf32> to vector<2xf32>
    %131 = vector.shape_cast %130 : vector<2xf32> to vector<2x1xf32>
    %132 = vector.broadcast %131 : vector<2x1xf32> to vector<2x4xf32>
    %133 = arith.subf %129, %132 : vector<2x4xf32>
    %134 = math.exp %133 : vector<2x4xf32>
    %cst_41 = arith.constant dense<0.000000e+00> : vector<2xf32>
    %135 = vector.multi_reduction <add>, %134, %cst_41 [1] : vector<2x4xf32> to vector<2xf32>
    %136 = vector.shape_cast %135 : vector<2xf32> to vector<2x1xf32>
    %137 = vector.broadcast %136 : vector<2x1xf32> to vector<2x4xf32>
    %138 = arith.divf %134, %137 : vector<2x4xf32>
    %c0_42 = arith.constant 0 : index
    %c0_43 = arith.constant 0 : index
    %139 = vector.load %arg11[%c0_42, %c0_43] : memref<2x4xf32, #tpu.memory_space<vmem>>, vector<2x4xf32>
    tpu.vector_store %arg11[%c0_42, %c0_43], %138 {strides = array<i32>} : memref<2x4xf32, #tpu.memory_space<vmem>>, vector<2x4xf32>,
    return
  }
}

</mosaic_0001>

<llo_original>
// kernel: ea_forward.1
$region0: #{ea_forward.1}
  #allocation0 [shape = 'u32[]', space=smem, size = 0x4, offset = 0x4, fixed_abs, tag = 'smem constant byte address 0x4 - core index']
  #allocation1 [shape = 'u32[72,128]{1,0:T(1,128)}', space=vmem, size = 0x9000, scoped, tag = 'internal scratch']
  %s0 = inlined_call_operand.vmem [shape: s32[32,1], index: 0, kind: input, shape index: {}]
  %s1 = inlined_call_operand.vmem [shape: s32[32,1], index: 1, kind: input, shape index: {}]
  %s2 = inlined_call_operand.vmem [shape: s32[32,1], index: 2, kind: input, shape index: {}]
  %s3 = inlined_call_operand.vmem [shape: s32[2,1], index: 3, kind: input, shape index: {}]
  %s4 = inlined_call_operand.vmem [shape: s32[2,1], index: 4, kind: input, shape index: {}]
  %s5 = inlined_call_operand.vmem [shape: f32[32,1], index: 5, kind: input, shape index: {}]
  %s6 = inlined_call_operand.vmem [shape: f32[40,224], index: 6, kind: input, shape index: {}]
  %s7 = inlined_call_operand.vmem [shape: f32[40,96], index: 7, kind: input, shape index: {}]
  %s8 = inlined_call_operand.vmem [shape: f32[96,2], index: 8, kind: input, shape index: {}]
  %s9 = inlined_call_operand.vmem [shape: f32[96,4], index: 9, kind: input, shape index: {}]
  %s10 = inlined_call_operand.vmem [shape: f32[1,36], index: 10, kind: input, shape index: {}]
  %s11 = inlined_call_operand.hbm [shape: f32[2,4], index: 11, kind: output, shape index: {}]
  %s12 = sld [smem:[#allocation0]]
  $region54: #{ea_forward.1} parent=0
    _
  %s14 = ssub.s32 1, %s12
  %s15 = scalar_select 0, %s14, %s12
  $region1: #{ea_forward.1} parent=0
    #allocation2 [shape = 'u8[1024]{0}', space=vmem, size = 0x400, scoped, tag = 'output window, operand 0, single buffered']
    #allocation3 [shape = 's32[1]{0}', space=sflag, size = 0x4, scoped, tag = 'scoped memory for ea_forward.1']
    %16 = vsyncpa [#allocation3], 0
    // Predicated region
    $region2: #{ea_forward.1} parent=1 // pred_check
      _
    $region3: #{ea_forward.1} parent=1 // pred_check_branch
      %18 = sbr.rel (0) target = $region5
    $region4: #{ea_forward.1} parent=1 // pred_region
      _
    $region5: #{ea_forward.1} parent=1 // pred_fallthru
      _
    // Predicated region
    $region6: #{ea_forward.1} parent=1 // pred_check
      _
    $region7: #{ea_forward.1} parent=1 // pred_check_branch
      %20 = sbr.rel (0) target = $region9
    $region8: #{ea_forward.1} parent=1 // pred_region
      _
    $region9: #{ea_forward.1} parent=1 // pred_fallthru
      _
    // Predicated region
    $region10: #{ea_forward.1} parent=1 // pred_check
      _
    $region11: #{ea_forward.1} parent=1 // pred_check_branch
      %22 = sbr.rel (0) target = $region13
    $region12: #{ea_forward.1} parent=1 // pred_region
      _
    $region13: #{ea_forward.1} parent=1 // pred_fallthru
      _
    // Predicated region
    $region14: #{ea_forward.1} parent=1 // pred_check
      _
    $region15: #{ea_forward.1} parent=1 // pred_check_branch
      %24 = sbr.rel (0) target = $region17
    $region16: #{ea_forward.1} parent=1 // pred_region
      _
    $region17: #{ea_forward.1} parent=1 // pred_fallthru
      _
    // Predicated region
    $region18: #{ea_forward.1} parent=1 // pred_check
      _
    $region19: #{ea_forward.1} parent=1 // pred_check_branch
      %26 = sbr.rel (0) target = $region21
    $region20: #{ea_forward.1} parent=1 // pred_region
      _
    $region21: #{ea_forward.1} parent=1 // pred_fallthru
      _
    // Predicated region
    $region22: #{ea_forward.1} parent=1 // pred_check
      _
    $region23: #{ea_forward.1} parent=1 // pred_check_branch
      %28 = sbr.rel (0) target = $region25
    $region24: #{ea_forward.1} parent=1 // pred_region
      _
    $region25: #{ea_forward.1} parent=1 // pred_fallthru
      _
    // Predicated region
    $region26: #{ea_forward.1} parent=1 // pred_check
      _
    $region27: #{ea_forward.1} parent=1 // pred_check_branch
      %30 = sbr.rel (0) target = $region29
    $region28: #{ea_forward.1} parent=1 // pred_region
      _
    $region29: #{ea_forward.1} parent=1 // pred_fallthru
      _
    // Predicated region
    $region30: #{ea_forward.1} parent=1 // pred_check
      _
    $region31: #{ea_forward.1} parent=1 // pred_check_branch
      %32 = sbr.rel (0) target = $region33
    $region32: #{ea_forward.1} parent=1 // pred_region
      _
    $region33: #{ea_forward.1} parent=1 // pred_fallthru
      _
    // Predicated region
    $region34: #{ea_forward.1} parent=1 // pred_check
      _
    $region35: #{ea_forward.1} parent=1 // pred_check_branch
      %34 = sbr.rel (0) target = $region37
    $region36: #{ea_forward.1} parent=1 // pred_region
      _
    $region37: #{ea_forward.1} parent=1 // pred_fallthru
      _
    // Predicated region
    $region38: #{ea_forward.1} parent=1 // pred_check
      _
    $region39: #{ea_forward.1} parent=1 // pred_check_branch
      %36 = sbr.rel (0) target = $region41
    $region40: #{ea_forward.1} parent=1 // pred_region
      _
    $region41: #{ea_forward.1} parent=1 // pred_fallthru
      _
    // Predicated region
    $region42: #{ea_forward.1} parent=1 // pred_check
      _
    $region43: #{ea_forward.1} parent=1 // pred_check_branch
      %38 = sbr.rel (0) target = $region45
    $region44: #{ea_forward.1} parent=1 // pred_region
      _
    $region45: #{ea_forward.1} parent=1 // pred_fallthru
      _
    %v39 = vld [vmem:[%s5] sm:$0xff]
    %v40 = vld [vmem:[%s5 + $0x8] sm:$0xff]
    %v41 = vld [vmem:[%s5 + $0x10] sm:$0xff]
    %v42 = vld [vmem:[%s5 + $0x18] sm:$0xff]
    %v43 = vlaneseq
    %v44 = vand.u32 %v43, 127
    %v45 = vld [vmem:[%s0] sm:$0xff]
    %v46 = vld [vmem:[%s0 + $0x8] sm:$0xff]
    %v47 = vld [vmem:[%s0 + $0x10] sm:$0xff]
    %v48 = vld [vmem:[%s0 + $0x18] sm:$0xff]
    %49 = vset.pattern.permute.xlu0 0
    %50 = vperm.xlu0 %49, %v45
    %v51 = vpop.permute.xlu0 %50
    %52 = vset.pattern.permute.xlu0 0
    %53 = vperm.xlu0 %52, %v46
    %v54 = vpop.permute.xlu0 %53
    %55 = vset.pattern.permute.xlu0 0
    %56 = vperm.xlu0 %55, %v47
    %v57 = vpop.permute.xlu0 %56
    %58 = vset.pattern.permute.xlu0 0
    %59 = vperm.xlu0 %58, %v48
    %v60 = vpop.permute.xlu0 %59
    %vm61 = vcmp.eq.s32.totalorder %v44, %v51
    %vm62 = vcmp.eq.s32.totalorder %v44, %v54
    %vm63 = vcmp.eq.s32.totalorder %v44, %v57
    %vm64 = vcmp.eq.s32.totalorder %v44, %v60
    %v65 = vld [vmem:[%s1] sm:$0xff]
    %v66 = vld [vmem:[%s1 + $0x8] sm:$0xff]
    %v67 = vld [vmem:[%s1 + $0x10] sm:$0xff]
    %v68 = vld [vmem:[%s1 + $0x18] sm:$0xff]
    %v69 = vadd.s32 %v65, 20
    %v70 = vadd.s32 %v66, 20
    %v71 = vadd.s32 %v67, 20
    %v72 = vadd.s32 %v68, 20
    %73 = vset.pattern.permute.xlu0 0
    %74 = vperm.xlu0 %73, %v69
    %v75 = vpop.permute.xlu0 %74
    %76 = vset.pattern.permute.xlu0 0
    %77 = vperm.xlu0 %76, %v70
    %v78 = vpop.permute.xlu0 %77
    %79 = vset.pattern.permute.xlu0 0
    %80 = vperm.xlu0 %79, %v71
    %v81 = vpop.permute.xlu0 %80
    %82 = vset.pattern.permute.xlu0 0
    %83 = vperm.xlu0 %82, %v72
    %v84 = vpop.permute.xlu0 %83
    %vm85 = vcmp.eq.s32.totalorder %v44, %v75
    %vm86 = vcmp.eq.s32.totalorder %v44, %v78
    %vm87 = vcmp.eq.s32.totalorder %v44, %v81
    %vm88 = vcmp.eq.s32.totalorder %v44, %v84
    %vm89 = vmor %vm61, %vm85
    %vm90 = vmor %vm62, %vm86
    %vm91 = vmor %vm63, %vm87
    %vm92 = vmor %vm64, %vm88
    %v93 = vld [vmem:[%s2] sm:$0xff]
    %v94 = vld [vmem:[%s2 + $0x8] sm:$0xff]
    %v95 = vld [vmem:[%s2 + $0x10] sm:$0xff]
    %v96 = vld [vmem:[%s2 + $0x18] sm:$0xff]
    %v97 = vadd.s32 %v93, 20
    %v98 = vadd.s32 %v94, 20
    %v99 = vadd.s32 %v95, 20
    %v100 = vadd.s32 %v96, 20
    %v101 = vadd.s32 %v97, 10
    %v102 = vadd.s32 %v98, 10
    %v103 = vadd.s32 %v99, 10
    %v104 = vadd.s32 %v100, 10
    %105 = vset.pattern.permute.xlu0 0
    %106 = vperm.xlu0 %105, %v101
    %v107 = vpop.permute.xlu0 %106
    %108 = vset.pattern.permute.xlu0 0
    %109 = vperm.xlu0 %108, %v102
    %v110 = vpop.permute.xlu0 %109
    %111 = vset.pattern.permute.xlu0 0
    %112 = vperm.xlu0 %111, %v103
    %v113 = vpop.permute.xlu0 %112
    %114 = vset.pattern.permute.xlu0 0
    %115 = vperm.xlu0 %114, %v104
    %v116 = vpop.permute.xlu0 %115
    %vm117 = vcmp.eq.s32.totalorder %v44, %v107
    %vm118 = vcmp.eq.s32.totalorder %v44, %v110
    %vm119 = vcmp.eq.s32.totalorder %v44, %v113
    %vm120 = vcmp.eq.s32.totalorder %v44, %v116
    %vm121 = vmor %vm89, %vm117
    %vm122 = vmor %vm90, %vm118
    %vm123 = vmor %vm91, %vm119
    %vm124 = vmor %vm92, %vm120
    %v125 = vsel %vm121, 1, 0
    %v126 = vsel %vm122, 1, 0
    %v127 = vsel %vm123, 1, 0
    %v128 = vsel %vm124, 1, 0
    %v129 = vcvt.s32.f32 %v125
    %v130 = vcvt.s32.f32 %v126
    %v131 = vcvt.s32.f32 %v127
    %v132 = vcvt.s32.f32 %v128
    %134 = vset.pattern.permute.xlu0 0
    %135 = vperm.xlu0 %134, %v39
    %v136 = vpop.permute.xlu0 %135
    %139 = vset.pattern.permute.xlu0 0
    %140 = vperm.xlu0 %139, %v40
    %v141 = vpop.permute.xlu0 %140
    %144 = vset.pattern.permute.xlu0 0
    %145 = vperm.xlu0 %144, %v41
    %v146 = vpop.permute.xlu0 %145
    %149 = vset.pattern.permute.xlu0 0
    %150 = vperm.xlu0 %149, %v42
    %v151 = vpop.permute.xlu0 %150
    %v153 = vmul.f32 %v129, %v136
    %v154 = vmul.f32 %v130, %v141
    %v155 = vmul.f32 %v131, %v146
    %v156 = vmul.f32 %v132, %v151
    %v157 = vld [vmem:[%s6] sm:$0xff]
    %v158 = vld [vmem:[%s6 + $0x8] sm:$0xff]
    %v159 = vld [vmem:[%s6 + $0x10] sm:$0xff]
    %v160 = vld [vmem:[%s6 + $0x18] sm:$0xff]
    %v161 = vld [vmem:[%s6 + $0x20] sm:$0xff]
    %v162 = vld [vmem:[%s6 + $0x28] sm:$0xff]
    %v163 = vld [vmem:[%s6 + $0x30] sm:$0xff]
    %v164 = vld [vmem:[%s6 + $0x38] sm:$0xff]
    %v165 = vld [vmem:[%s6 + $0x40] sm:$0xff]
    %v166 = vld [vmem:[%s6 + $0x48] sm:$0xff]
    %vm167 = vcmask 326656
    %v169 = vsel %vm167, %v153, 0
    %v172 = vsel %vm167, %v154, 0
    %v175 = vsel %vm167, %v155, 0
    %v178 = vsel %vm167, %v156, 0
    %180 = vmatpush.msra.mxu0 0.0
    %181 = vmatpush.msra.mxu0 0.0
    %182 = vmatpush.msra.mxu0 0.0
    %183 = vmatpush.msra.mxu0 0.0
    %184 = vmatpush.msra.mxu0 0.0
    %185 = vmatpush.msra.mxu0 0.0
    %186 = vmatpush.msra.mxu0 0.0
    %187 = vmatpush.msra.mxu0 0.0
    %188 = vmatpush.msra.mxu0 0.0
    %189 = vmatpush.msra.mxu0 0.0
    %190 = vmatpush.msra.mxu0 0.0
    %191 = vmatpush.msra.mxu0 %v165
    %192 = vmatpush.msra.mxu0 %v163
    %193 = vmatpush.msra.mxu0 %v161
    %194 = vmatpush.msra.mxu0 %v159
    %195 = vmatpush.msra.mxu0 %v157
    %196 = vmatmul.f32.gmra.mxu0 %v169
    %v197 = vpop.f32.mrf.mxu0
    %v198 = vadd.f32 0.0, %v197
    %199 = vmatmul.f32.gmra.mxu0 %v172
    %v200 = vpop.f32.mrf.mxu0
    %v201 = vadd.f32 0.0, %v200
    %202 = vmatmul.f32.gmra.mxu0 %v175
    %v203 = vpop.f32.mrf.mxu0
    %v204 = vadd.f32 0.0, %v203
    %205 = vmatmul.f32.gmra.mxu0 %v178
    %v206 = vpop.f32.mrf.mxu0
    %v207 = vadd.f32 0.0, %v206
    %208 = vdwg.mxu0
    %209 = vmatpush.msra.mxu0 0.0
    %210 = vmatpush.msra.mxu0 0.0
    %211 = vmatpush.msra.mxu0 0.0
    %212 = vmatpush.msra.mxu0 0.0
    %213 = vmatpush.msra.mxu0 0.0
    %214 = vmatpush.msra.mxu0 0.0
    %215 = vmatpush.msra.mxu0 0.0
    %216 = vmatpush.msra.mxu0 0.0
    %217 = vmatpush.msra.mxu0 0.0
    %218 = vmatpush.msra.mxu0 0.0
    %219 = vmatpush.msra.mxu0 0.0
    %220 = vmatpush.msra.mxu0 %v166
    %221 = vmatpush.msra.mxu0 %v164
    %222 = vmatpush.msra.mxu0 %v162
    %223 = vmatpush.msra.mxu0 %v160
    %224 = vmatpush.msra.mxu0 %v158
    %225 = vmatmul.f32.gmra.mxu0 %v169
    %v226 = vpop.f32.mrf.mxu0
    %v227 = vadd.f32 0.0, %v226
    %228 = vmatmul.f32.gmra.mxu0 %v172
    %v229 = vpop.f32.mrf.mxu0
    %v230 = vadd.f32 0.0, %v229
    %231 = vmatmul.f32.gmra.mxu0 %v175
    %v232 = vpop.f32.mrf.mxu0
    %v233 = vadd.f32 0.0, %v232
    %234 = vmatmul.f32.gmra.mxu0 %v178
    %v235 = vpop.f32.mrf.mxu0
    %v236 = vadd.f32 0.0, %v235
    %237 = vdwg.mxu0
    %v238 = vld [vmem:[%s3] sm:$0x3]
    %239 = vset.pattern.permute.xlu0 0
    %240 = vperm.xlu0 %239, %v238
    %v241 = vpop.permute.xlu0 %240
    %vm242 = vcmp.eq.s32.totalorder %v44, %v241
    %v243 = vld [vmem:[%s4] sm:$0x3]
    %v244 = vadd.s32 %v243, 20
    %245 = vset.pattern.permute.xlu0 0
    %246 = vperm.xlu0 %245, %v244
    %v247 = vpop.permute.xlu0 %246
    %vm248 = vcmp.eq.s32.totalorder %v44, %v247
    %vm249 = vmor %vm242, %vm248
    %v250 = vsel %vm249, 1, 0
    %v251 = vcvt.s32.f32 %v250
    %v252 = vld [vmem:[%s7] sm:$0xff]
    %v253 = vld [vmem:[%s7 + $0x8] sm:$0xff]
    %v254 = vld [vmem:[%s7 + $0x10] sm:$0xff]
    %v255 = vld [vmem:[%s7 + $0x18] sm:$0xff]
    %v256 = vld [vmem:[%s7 + $0x20] sm:$0xff]
    %v258 = vsel %vm167, %v251, 0
    %260 = vmatpush.msra.mxu0 0.0
    %261 = vmatpush.msra.mxu0 0.0
    %262 = vmatpush.msra.mxu0 0.0
    %263 = vmatpush.msra.mxu0 0.0
    %264 = vmatpush.msra.mxu0 0.0
    %265 = vmatpush.msra.mxu0 0.0
    %266 = vmatpush.msra.mxu0 0.0
    %267 = vmatpush.msra.mxu0 0.0
    %268 = vmatpush.msra.mxu0 0.0
    %269 = vmatpush.msra.mxu0 0.0
    %270 = vmatpush.msra.mxu0 0.0
    %271 = vmatpush.msra.mxu0 %v256
    %272 = vmatpush.msra.mxu0 %v255
    %273 = vmatpush.msra.mxu0 %v254
    %274 = vmatpush.msra.mxu0 %v253
    %275 = vmatpush.msra.mxu0 %v252
    %276 = vmatmul.f32.gmra.mxu0 %v258
    %v277 = vpop.f32.mrf.mxu0
    %v278 = vadd.f32 0.0, %v277
    %279 = vdwg.mxu0
    %v281 = vrot.slane %v278, 1
    %v282 = vperm.slane %v278, 0
    %v283 = vperm.slane %v281, 0
    %284 = vrot.lane.b32.xlu0 %v282, 32
    %v285 = vpop.permute.xlu0 %284
    %286 = vrot.lane.b32.xlu0 %v283, 32
    %v287 = vpop.permute.xlu0 %286
    %v290 = vadd.f32 %v198, %v285
    %v291 = vadd.f32 %v201, %v285
    %v292 = vadd.f32 %v204, %v287
    %v293 = vadd.f32 %v207, %v287
    %v294 = vtanh.pop %v290
    %v295 = vtanh.pop %v291
    %v296 = vtanh.pop %v292
    %v297 = vtanh.pop %v293
    %v298 = vld [vmem:[%s8] sm:$0xff]
    %v299 = vld [vmem:[%s8 + $0x8] sm:$0xff]
    %v300 = vld [vmem:[%s8 + $0x10] sm:$0xff]
    %v301 = vld [vmem:[%s8 + $0x18] sm:$0xff]
    %v302 = vld [vmem:[%s8 + $0x20] sm:$0xff]
    %v303 = vld [vmem:[%s8 + $0x28] sm:$0xff]
    %v304 = vld [vmem:[%s8 + $0x30] sm:$0xff]
    %v305 = vld [vmem:[%s8 + $0x38] sm:$0xff]
    %v306 = vld [vmem:[%s8 + $0x40] sm:$0xff]
    %v307 = vld [vmem:[%s8 + $0x48] sm:$0xff]
    %v308 = vld [vmem:[%s8 + $0x50] sm:$0xff]
    %v309 = vld [vmem:[%s8 + $0x58] sm:$0xff]
    %314 = vrot.lane.b32.xlu0 %v294, 96
    %v315 = vpop.permute.xlu0 %314
    %316 = vrot.lane.b32.xlu0 %v295, 96
    %v317 = vpop.permute.xlu0 %316
    %318 = vrot.lane.b32.xlu0 %v296, 96
    %v319 = vpop.permute.xlu0 %318
    %320 = vrot.lane.b32.xlu0 %v297, 96
    %v321 = vpop.permute.xlu0 %320
    %vm322 = vcmask 785408
    %v323 = vsel %vm322, %v315, 0
    %v325 = vsel %vm322, %v317, 0
    %v327 = vsel %vm322, %v319, 0
    %v329 = vsel %vm322, %v321, 0
    %331 = vmatpush.msra.mxu0 0.0
    %332 = vmatpush.msra.mxu0 0.0
    %333 = vmatpush.msra.mxu0 0.0
    %334 = vmatpush.msra.mxu0 0.0
    %335 = vmatpush.msra.mxu0 %v309
    %336 = vmatpush.msra.mxu0 %v308
    %337 = vmatpush.msra.mxu0 %v307
    %338 = vmatpush.msra.mxu0 %v306
    %339 = vmatpush.msra.mxu0 %v305
    %340 = vmatpush.msra.mxu0 %v304
    %341 = vmatpush.msra.mxu0 %v303
    %342 = vmatpush.msra.mxu0 %v302
    %343 = vmatpush.msra.mxu0 %v301
    %344 = vmatpush.msra.mxu0 %v300
    %345 = vmatpush.msra.mxu0 %v299
    %346 = vmatpush.msra.mxu0 %v298
    %347 = vmatmul.f32.gmra.mxu0 %v323
    %v348 = vpop.f32.mrf.mxu0
    %v349 = vadd.f32 0.0, %v348
    %350 = vmatmul.f32.gmra.mxu0 %v325
    %v351 = vpop.f32.mrf.mxu0
    %v352 = vadd.f32 0.0, %v351
    %353 = vmatmul.f32.gmra.mxu0 %v327
    %v354 = vpop.f32.mrf.mxu0
    %v355 = vadd.f32 0.0, %v354
    %356 = vmatmul.f32.gmra.mxu0 %v329
    %v357 = vpop.f32.mrf.mxu0
    %v358 = vadd.f32 0.0, %v357
    %359 = vdwg.mxu0
    %vm360 = vcmp.gt.f32.partialorder %v39, 0.0
    %vm361 = vcmp.gt.f32.partialorder %v40, 0.0
    %vm362 = vcmp.gt.f32.partialorder %v41, 0.0
    %vm363 = vcmp.gt.f32.partialorder %v42, 0.0
    %v364 = vsel %vm360, 1, 0
    %v365 = vsel %vm361, 1, 0
    %v366 = vsel %vm362, 1, 0
    %v367 = vsel %vm363, 1, 0
    %368 = vset.pattern.permute.xlu0 0
    %369 = vperm.xlu0 %368, %v364
    %v370 = vpop.permute.xlu0 %369
    %371 = vset.pattern.permute.xlu0 0
    %372 = vperm.xlu0 %371, %v365
    %v373 = vpop.permute.xlu0 %372
    %374 = vset.pattern.permute.xlu0 0
    %375 = vperm.xlu0 %374, %v366
    %v376 = vpop.permute.xlu0 %375
    %377 = vset.pattern.permute.xlu0 0
    %378 = vperm.xlu0 %377, %v367
    %v379 = vpop.permute.xlu0 %378
    %vm380 = vcmp.eq.s32.totalorder %v370, 1
    %vm381 = vcmp.eq.s32.totalorder %v373, 1
    %vm382 = vcmp.eq.s32.totalorder %v376, 1
    %vm383 = vcmp.eq.s32.totalorder %v379, 1
    %v384 = vsel %vm380, %v349, -1e+30
    %v385 = vsel %vm381, %v352, -1e+30
    %v386 = vsel %vm382, %v355, -1e+30
    %v387 = vsel %vm383, %v358, -1e+30
    %vm388 = vcmask 15360
    %v389 = vsel %vm388, %v384, -inf
    %v390 = vsel %vm388, %v385, -inf
    %v391 = vmax.f32 %v389, %v390
    %v392 = vrot.slane %v391, 4
    %v393 = vmax.f32 %v391, %v392
    %v394 = vrot.slane %v393, 2
    %v395 = vmax.f32 %v393, %v394
    %v396 = vrot.slane %v395, 1
    %v397 = vmax.f32 %v395, %v396
    %v398 = vsel %vm388, %v386, -inf
    %v399 = vsel %vm388, %v387, -inf
    %v400 = vmax.f32 %v398, %v399
    %v401 = vrot.slane %v400, 4
    %v402 = vmax.f32 %v400, %v401
    %v403 = vrot.slane %v402, 2
    %v404 = vmax.f32 %v402, %v403
    %v405 = vrot.slane %v404, 1
    %v406 = vmax.f32 %v404, %v405
    %v407 = vsub.f32 %v384, %v397
    %v408 = vsub.f32 %v385, %v397
    %v409 = vsub.f32 %v386, %v406
    %v410 = vsub.f32 %v387, %v406
    %v411 = vmul.f32 %v407, 1.442695
    %v412 = vpow.pop %v411
    %v413 = vmul.f32 %v408, 1.442695
    %v414 = vpow.pop %v413
    %v415 = vmul.f32 %v409, 1.442695
    %v416 = vpow.pop %v415
    %v417 = vmul.f32 %v410, 1.442695
    %v418 = vpow.pop %v417
    %v419 = vsel %vm388, %v412, 0.0
    %v420 = vsel %vm388, %v414, 0.0
    %v421 = vadd.f32 %v419, %v420
    %v422 = vrot.slane %v421, 4
    %v423 = vadd.f32 %v421, %v422
    %v424 = vrot.slane %v423, 2
    %v425 = vadd.f32 %v423, %v424
    %v426 = vrot.slane %v425, 1
    %v427 = vadd.f32 %v425, %v426
    %v428 = vsel %vm388, %v416, 0.0
    %v429 = vsel %vm388, %v418, 0.0
    %v430 = vadd.f32 %v428, %v429
    %v431 = vrot.slane %v430, 4
    %v432 = vadd.f32 %v430, %v431
    %v433 = vrot.slane %v432, 2
    %v434 = vadd.f32 %v432, %v433
    %v435 = vrot.slane %v434, 1
    %v436 = vadd.f32 %v434, %v435
    %v437 = vrcp.pop %v427
    %v438 = vmul.f32 %v427, %v437
    %v439 = vsub.f32 1.0, %v438
    %v440 = vmul.f32 %v437, %v439
    %v441 = vadd.f32 %v437, %v440
    %vm442 = vweird.f32 %v427
    %vm443 = vweird.f32 %v437
    %vm444 = vmor %vm442, %vm443
    %v445 = vsel %vm444, %v437, %v441
    %v446 = vand.u32 2147483647, %v427
    %vm447 = vcmp.eq.f32.partialorder %v446, 8.507059e+37
    %v448 = vand.u32 %v427, 2147483648
    %v449 = vor.u32 1.1754944e-38, %v448
    %v450 = vsel %vm447, %v449, %v445
    %v451 = vmul.f32 %v412, %v450
    %v452 = vmul.f32 %v414, %v450
    %v453 = vrcp.pop %v436
    %v454 = vmul.f32 %v436, %v453
    %v455 = vsub.f32 1.0, %v454
    %v456 = vmul.f32 %v453, %v455
    %v457 = vadd.f32 %v453, %v456
    %vm458 = vweird.f32 %v436
    %vm459 = vweird.f32 %v453
    %vm460 = vmor %vm458, %vm459
    %v461 = vsel %vm460, %v453, %v457
    %v462 = vand.u32 2147483647, %v436
    %vm463 = vcmp.eq.f32.partialorder %v462, 8.507059e+37
    %v464 = vand.u32 %v436, 2147483648
    %v465 = vor.u32 1.1754944e-38, %v464
    %v466 = vsel %vm463, %v465, %v461
    %v467 = vmul.f32 %v416, %v466
    %v468 = vmul.f32 %v418, %v466
    %470 = vset.pattern.permute.xlu0 0
    %471 = vperm.xlu0 %470, %v451
    %v472 = vpop.permute.xlu0 %471
    %475 = vset.pattern.permute.xlu0 0
    %476 = vperm.xlu0 %475, %v452
    %v477 = vpop.permute.xlu0 %476
    %480 = vset.pattern.permute.xlu0 0
    %481 = vperm.xlu0 %480, %v467
    %v482 = vpop.permute.xlu0 %481
    %485 = vset.pattern.permute.xlu0 0
    %486 = vperm.xlu0 %485, %v468
    %v487 = vpop.permute.xlu0 %486
    %v489 = vmul.f32 %v472, %v198
    %v490 = vmul.f32 %v477, %v201
    %v491 = vmul.f32 %v482, %v204
    %v492 = vmul.f32 %v487, %v207
    %vm493 = vcmask 261120
    %v494 = vsel %vm493, %v489, 0.0
    %v495 = vsel %vm493, %v490, 0.0
    %v496 = vadd.f32 %v494, %v495
    %v497 = vrot.slane %v496, 4
    %v498 = vadd.f32 %v496, %v497
    %v499 = vrot.slane %v498, 2
    %v500 = vadd.f32 %v498, %v499
    %v501 = vrot.slane %v500, 1
    %v502 = vadd.f32 %v500, %v501
    %v503 = vsel %vm493, %v491, 0.0
    %v504 = vsel %vm493, %v492, 0.0
    %v505 = vadd.f32 %v503, %v504
    %v506 = vrot.slane %v505, 4
    %v507 = vadd.f32 %v505, %v506
    %v508 = vrot.slane %v507, 2
    %v509 = vadd.f32 %v507, %v508
    %v510 = vrot.slane %v509, 1
    %v511 = vadd.f32 %v509, %v510
    %512 = vset.pattern.permute.xlu0 1
    %513 = vperm.xlu0 %512, %v451
    %v514 = vpop.permute.xlu0 %513
    %516 = vset.pattern.permute.xlu0 1
    %517 = vperm.xlu0 %516, %v452
    %v518 = vpop.permute.xlu0 %517
    %520 = vset.pattern.permute.xlu0 1
    %521 = vperm.xlu0 %520, %v467
    %v522 = vpop.permute.xlu0 %521
    %524 = vset.pattern.permute.xlu0 1
    %525 = vperm.xlu0 %524, %v468
    %v526 = vpop.permute.xlu0 %525
    %v528 = vmul.f32 %v514, %v198
    %v529 = vmul.f32 %v518, %v201
    %v530 = vmul.f32 %v522, %v204
    %v531 = vmul.f32 %v526, %v207
    %v532 = vsel %vm493, %v528, 0.0
    %v533 = vsel %vm493, %v529, 0.0
    %v534 = vadd.f32 %v532, %v533
    %v535 = vrot.slane %v534, 4
    %v536 = vadd.f32 %v534, %v535
    %v537 = vrot.slane %v536, 2
    %v538 = vadd.f32 %v536, %v537
    %v539 = vrot.slane %v538, 1
    %v540 = vadd.f32 %v538, %v539
    %v541 = vsel %vm493, %v530, 0.0
    %v542 = vsel %vm493, %v531, 0.0
    %v543 = vadd.f32 %v541, %v542
    %v544 = vrot.slane %v543, 4
    %v545 = vadd.f32 %v543, %v544
    %v546 = vrot.slane %v545, 2
    %v547 = vadd.f32 %v545, %v546
    %v548 = vrot.slane %v547, 1
    %v549 = vadd.f32 %v547, %v548
    %v550 = vlaneseq
    %v551 = vshrl.u32 %v550, 7
    %v552 = vadd.s32 %v551, 8
    %v553 = vadd.s32 %v551, 16
    %v554 = vadd.s32 %v551, 24
    %vm555 = vcmp.lt.s32.totalorder %v551, 0
    %v556 = vsub.s32 0, %v551
    %v557 = vsel %vm555, %v556, %v551
    %v558 = vshrl.u32 %v557, 4
    %v559 = vand.u32 %v557, 15
    %v560 = vsub.s32 0, %v559
    %v561 = vsel %vm555, %v560, %v559
    %vm562 = vcmp.lt.s32.totalorder %v552, 0
    %v563 = vsub.s32 0, %v552
    %v564 = vsel %vm562, %v563, %v552
    %v565 = vshrl.u32 %v564, 4
    %v566 = vand.u32 %v564, 15
    %v567 = vsub.s32 0, %v566
    %v568 = vsel %vm562, %v567, %v566
    %vm569 = vcmp.lt.s32.totalorder %v553, 0
    %v570 = vsub.s32 0, %v553
    %v571 = vsel %vm569, %v570, %v553
    %v572 = vshrl.u32 %v571, 4
    %v573 = vand.u32 %v571, 15
    %v574 = vsub.s32 0, %v573
    %v575 = vsel %vm569, %v574, %v573
    %vm576 = vcmp.lt.s32.totalorder %v554, 0
    %v577 = vsub.s32 0, %v554
    %v578 = vsel %vm576, %v577, %v554
    %v579 = vshrl.u32 %v578, 4
    %v580 = vand.u32 %v578, 15
    %v581 = vsub.s32 0, %v580
    %v582 = vsel %vm576, %v581, %v580
    %vm583 = vcmp.ne.s32.totalorder %v561, 0
    %vm584 = vcmp.ne.s32.totalorder %v568, 0
    %vm585 = vcmp.ne.s32.totalorder %v575, 0
    %vm586 = vcmp.ne.s32.totalorder %v582, 0
    %vm587 = vcmp.lt.s32.totalorder %v561, 0
    %vm588 = vcmp.lt.s32.totalorder %v568, 0
    %vm589 = vcmp.lt.s32.totalorder %v575, 0
    %vm590 = vcmp.lt.s32.totalorder %v582, 0
    %vm591 = vmand %vm587, %vm583
    %vm592 = vmand %vm588, %vm584
    %vm593 = vmand %vm589, %vm585
    %vm594 = vmand %vm590, %vm586
    %v595 = vadd.s32 %v561, 16
    %v596 = vadd.s32 %v568, 16
    %v597 = vadd.s32 %v575, 16
    %v598 = vadd.s32 %v582, 16
    %v599 = vsel %vm591, %v595, %v561
    %v600 = vsel %vm592, %v596, %v568
    %v601 = vsel %vm593, %v597, %v575
    %v602 = vsel %vm594, %v598, %v582
    %vm603 = vcmp.gt.s32.totalorder %v599, 0
    %vm604 = vcmp.gt.s32.totalorder %v600, 0
    %vm605 = vcmp.gt.s32.totalorder %v601, 0
    %vm606 = vcmp.gt.s32.totalorder %v602, 0
    %v607 = vsel %vm603, 1, 0
    %v608 = vsel %vm604, 1, 0
    %v609 = vsel %vm605, 1, 0
    %v610 = vsel %vm606, 1, 0
    %v611 = vcvt.s32.f32 %v607
    %v612 = vcvt.s32.f32 %v608
    %v613 = vcvt.s32.f32 %v609
    %v614 = vcvt.s32.f32 %v610
    %vm615 = vcmp.lt.s32.totalorder %v599, 15
    %vm616 = vcmp.lt.s32.totalorder %v600, 15
    %vm617 = vcmp.lt.s32.totalorder %v601, 15
    %vm618 = vcmp.lt.s32.totalorder %v602, 15
    %v619 = vsel %vm615, 1, 0
    %v620 = vsel %vm616, 1, 0
    %v621 = vsel %vm617, 1, 0
    %v622 = vsel %vm618, 1, 0
    %v623 = vcvt.s32.f32 %v619
    %v624 = vcvt.s32.f32 %v620
    %v625 = vcvt.s32.f32 %v621
    %v626 = vcvt.s32.f32 %v622
    %v627 = vld [vmem:[%s10] sm:$0x1]
    %v629 = vperm.slane %v627, 0
    %630 = vrot.lane.b32.xlu0 %v629, 32
    %v631 = vpop.permute.xlu0 %630
    %v633 = vadd.f32 %v227, %v631
    %v634 = vadd.f32 %v230, %v631
    %v635 = vadd.f32 %v233, %v631
    %v636 = vadd.f32 %v236, %v631
    %v637 = vrot.slane %v227, 7
    %v638 = vrot.slane %v230, 7
    %v639 = vrot.slane %v233, 7
    %v640 = vrot.slane %v236, 7
    %vm641 = vcmp.lt.s32.totalorder %v551, 1
    %v642 = vsel %vm641, %v639, %v640
    %v643 = vsel %vm641, %v638, %v639
    %v644 = vsel %vm641, %v637, %v638
    %v645 = vsel %vm641, %v640, %v637
    %v646 = vmul.f32 %v611, %v645
    %v647 = vmul.f32 %v612, %v644
    %v648 = vmul.f32 %v613, %v643
    %v649 = vmul.f32 %v614, %v642
    %654 = vrot.lane.b32.xlu0 %v646, 32
    %v655 = vpop.permute.xlu0 %654
    %656 = vrot.lane.b32.xlu0 %v647, 32
    %v657 = vpop.permute.xlu0 %656
    %658 = vrot.lane.b32.xlu0 %v648, 32
    %v659 = vpop.permute.xlu0 %658
    %660 = vrot.lane.b32.xlu0 %v649, 32
    %v661 = vpop.permute.xlu0 %660
    %v666 = vadd.f32 %v633, %v655
    %v667 = vadd.f32 %v634, %v657
    %v668 = vadd.f32 %v635, %v659
    %v669 = vadd.f32 %v636, %v661
    %674 = vrot.lane.b32.xlu0 %v227, 64
    %v675 = vpop.permute.xlu0 %674
    %676 = vrot.lane.b32.xlu0 %v230, 64
    %v677 = vpop.permute.xlu0 %676
    %678 = vrot.lane.b32.xlu0 %v233, 64
    %v679 = vpop.permute.xlu0 %678
    %680 = vrot.lane.b32.xlu0 %v236, 64
    %v681 = vpop.permute.xlu0 %680
    %v686 = vrot.slane %v675, 1
    %v687 = vrot.slane %v677, 1
    %v688 = vrot.slane %v679, 1
    %v689 = vrot.slane %v681, 1
    %vm690 = vcmp.lt.s32.totalorder %v551, 7
    %v691 = vsel %vm690, %v688, %v689
    %v692 = vsel %vm690, %v687, %v688
    %v693 = vsel %vm690, %v686, %v687
    %v694 = vsel %vm690, %v689, %v686
    %v695 = vmul.f32 %v623, %v693
    %v696 = vmul.f32 %v624, %v692
    %v697 = vmul.f32 %v625, %v691
    %v698 = vmul.f32 %v626, %v694
    %703 = vrot.lane.b32.xlu0 %v695, 32
    %v704 = vpop.permute.xlu0 %703
    %705 = vrot.lane.b32.xlu0 %v696, 32
    %v706 = vpop.permute.xlu0 %705
    %707 = vrot.lane.b32.xlu0 %v697, 32
    %v708 = vpop.permute.xlu0 %707
    %709 = vrot.lane.b32.xlu0 %v698, 32
    %v710 = vpop.permute.xlu0 %709
    %v715 = vadd.f32 %v666, %v704
    %v716 = vadd.f32 %v667, %v706
    %v717 = vadd.f32 %v668, %v708
    %v718 = vadd.f32 %v669, %v710
    %vm719 = vcmask 523520
    %v720 = vsel %vm719, %v715, -inf
    %v721 = vsel %vm719, %v716, -inf
    %v722 = vmax.f32 %v720, %v721
    %v723 = vrot.slane %v722, 4
    %v724 = vmax.f32 %v722, %v723
    %v725 = vrot.slane %v724, 2
    %v726 = vmax.f32 %v724, %v725
    %v727 = vrot.slane %v726, 1
    %v728 = vmax.f32 %v726, %v727
    %v729 = vsel %vm719, %v717, -inf
    %v730 = vsel %vm719, %v718, -inf
    %v731 = vmax.f32 %v729, %v730
    %v732 = vrot.slane %v731, 4
    %v733 = vmax.f32 %v731, %v732
    %v734 = vrot.slane %v733, 2
    %v735 = vmax.f32 %v733, %v734
    %v736 = vrot.slane %v735, 1
    %v737 = vmax.f32 %v735, %v736
    %v738 = vtanh.pop %v728
    %v739 = vtanh.pop %v737
    %v740 = vld [vmem:[%s9] sm:$0xff]
    %v741 = vld [vmem:[%s9 + $0x8] sm:$0xff]
    %v742 = vld [vmem:[%s9 + $0x10] sm:$0xff]
    %v743 = vld [vmem:[%s9 + $0x18] sm:$0xff]
    %v744 = vld [vmem:[%s9 + $0x20] sm:$0xff]
    %v745 = vld [vmem:[%s9 + $0x28] sm:$0xff]
    %v746 = vld [vmem:[%s9 + $0x30] sm:$0xff]
    %v747 = vld [vmem:[%s9 + $0x38] sm:$0xff]
    %v748 = vld [vmem:[%s9 + $0x40] sm:$0xff]
    %v749 = vld [vmem:[%s9 + $0x48] sm:$0xff]
    %v750 = vld [vmem:[%s9 + $0x50] sm:$0xff]
    %v751 = vld [vmem:[%s9 + $0x58] sm:$0xff]
    %vm754 = vcmask 1041409
    %v755 = vsel %vm754, %v511, %v502
    %v756 = vsel %vm493, %v755, 0
    %758 = vmatpush.msra.mxu0 0.0
    %759 = vmatpush.msra.mxu0 0.0
    %760 = vmatpush.msra.mxu0 0.0
    %761 = vmatpush.msra.mxu0 0.0
    %762 = vmatpush.msra.mxu0 0.0
    %763 = vmatpush.msra.mxu0 0.0
    %764 = vmatpush.msra.mxu0 0.0
    %765 = vmatpush.msra.mxu0 0.0
    %766 = vmatpush.msra.mxu0 0.0
    %767 = vmatpush.msra.mxu0 0.0
    %768 = vmatpush.msra.mxu0 0.0
    %769 = vmatpush.msra.mxu0 0.0
    %770 = vmatpush.msra.mxu0 %v747
    %771 = vmatpush.msra.mxu0 %v746
    %772 = vmatpush.msra.mxu0 %v745
    %773 = vmatpush.msra.mxu0 %v744
    %774 = vmatmul.f32.gmra.mxu0 %v756
    %v775 = vpop.f32.mrf.mxu0
    %v776 = vadd.f32 0.0, %v775
    %777 = vdwg.mxu0
    %v780 = vsel %vm754, %v739, %v738
    %781 = vrot.lane.b32.xlu0 %v780, 96
    %v782 = vpop.permute.xlu0 %781
    %v783 = vsel %vm493, %v782, 0
    %785 = vmatpush.msra.mxu0 0.0
    %786 = vmatpush.msra.mxu0 0.0
    %787 = vmatpush.msra.mxu0 0.0
    %788 = vmatpush.msra.mxu0 0.0
    %789 = vmatpush.msra.mxu0 0.0
    %790 = vmatpush.msra.mxu0 0.0
    %791 = vmatpush.msra.mxu0 0.0
    %792 = vmatpush.msra.mxu0 0.0
    %793 = vmatpush.msra.mxu0 0.0
    %794 = vmatpush.msra.mxu0 0.0
    %795 = vmatpush.msra.mxu0 0.0
    %796 = vmatpush.msra.mxu0 0.0
    %797 = vmatpush.msra.mxu0 %v743
    %798 = vmatpush.msra.mxu0 %v742
    %799 = vmatpush.msra.mxu0 %v741
    %800 = vmatpush.msra.mxu0 %v740
    %801 = vmatmul.f32.gmra.mxu0 %v783
    %v802 = vpop.f32.mrf.mxu0
    %v803 = vadd.f32 %v776, %v802
    %804 = vdwg.mxu0
    %v807 = vsel %vm754, %v549, %v540
    %v808 = vsel %vm493, %v807, 0
    %810 = vmatpush.msra.mxu0 0.0
    %811 = vmatpush.msra.mxu0 0.0
    %812 = vmatpush.msra.mxu0 0.0
    %813 = vmatpush.msra.mxu0 0.0
    %814 = vmatpush.msra.mxu0 0.0
    %815 = vmatpush.msra.mxu0 0.0
    %816 = vmatpush.msra.mxu0 0.0
    %817 = vmatpush.msra.mxu0 0.0
    %818 = vmatpush.msra.mxu0 0.0
    %819 = vmatpush.msra.mxu0 0.0
    %820 = vmatpush.msra.mxu0 0.0
    %821 = vmatpush.msra.mxu0 0.0
    %822 = vmatpush.msra.mxu0 %v751
    %823 = vmatpush.msra.mxu0 %v750
    %824 = vmatpush.msra.mxu0 %v749
    %825 = vmatpush.msra.mxu0 %v748
    %826 = vmatmul.f32.gmra.mxu0 %v808
    %v827 = vpop.f32.mrf.mxu0
    %v828 = vadd.f32 0.0, %v827
    %829 = vdwg.mxu0
    %v830 = vadd.f32 %v803, %v828
    %831 = vrot.lane.b32.xlu0 %v629, 96
    %v832 = vpop.permute.xlu0 %831
    %v834 = vadd.f32 %v830, %v832
    %vm835 = vcmask 25600
    %v836 = vsel %vm835, %v834, -inf
    %837 = vmax.xlane.f32.xlu0 %v836
    %v838 = vpop.xlane.xlu0 %837
    %v839 = vsub.f32 %v834, %v838
    %v840 = vmul.f32 %v839, 1.442695
    %v841 = vpow.pop %v840
    %v842 = vsel %vm835, %v841, 0.0
    %843 = vadd.xlane.f32.xlu0 %v842
    %v844 = vpop.xlane.xlu0 %843
    %v845 = vrcp.pop %v844
    %v846 = vmul.f32 %v844, %v845
    %v847 = vsub.f32 1.0, %v846
    %v848 = vmul.f32 %v845, %v847
    %v849 = vadd.f32 %v845, %v848
    %vm850 = vweird.f32 %v844
    %vm851 = vweird.f32 %v845
    %vm852 = vmor %vm850, %vm851
    %v853 = vsel %vm852, %v845, %v849
    %v854 = vand.u32 2147483647, %v844
    %vm855 = vcmp.eq.f32.partialorder %v854, 8.507059e+37
    %v856 = vand.u32 %v844, 2147483648
    %v857 = vor.u32 1.1754944e-38, %v856
    %v858 = vsel %vm855, %v857, %v853
    %v859 = vmul.f32 %v841, %v858
    %860 = vst.msk [vmem:[#allocation2] sm:$0x3] %vm835, %v859
    // Predicated region
    $region46: #{ea_forward.1} parent=1 // pred_check
      _
    $region47: #{ea_forward.1} parent=1 // pred_check_branch
      %862 = sbr.rel (0) target = $region49
    $region48: #{ea_forward.1} parent=1 // pred_region
      %864 = vsyncadd [#allocation3], 0
      %s866 = sshll.u32 [#allocation2], 4
      %s867 = int_to_ptr.vmem [resolvable:$true] %s866
      %s868 = sshll.u32 %s11, 4
      %s869 = int_to_ptr.hbm [resolvable:$true] %s868
      %871 = dma.vmem_to_hbm [thread:$0]  %s867, 32, %s869, [#allocation3]
    $region49: #{ea_forward.1} parent=1 // pred_fallthru
      _
    // Predicated region
    $region50: #{ea_forward.1} parent=1 // pred_check
      _
    $region51: #{ea_forward.1} parent=1 // pred_check_branch
      %873 = sbr.rel (0) target = $region53
    $region52: #{ea_forward.1} parent=1 // pred_region
      %875 = dma.done [#allocation3], 32
    $region53: #{ea_forward.1} parent=1 // pred_fallthru
      _
    %876 = vsyncpa [#allocation3], 1

</llo_original>
